<compile_context>
chip_gen: v7x
topology: tpu7x:2x2x1
jax: 0.10.0
libtpu: 0.0.40
codegen_flags: <defaults>
</compile_context>

<pallas_src>
import functools

import jax
import jax.numpy as jnp
from jax.experimental import pallas as pl
from jax.experimental.pallas import tpu as pltpu


def _triplet_loss_kernel(margin_ref, a_ref, p_ref, n_ref, out_ref, *,
                         batch, tile_b, mask_rows):
    a = a_ref[...].astype(jnp.float32)
    p = p_ref[...].astype(jnp.float32)
    n = n_ref[...].astype(jnp.float32)
    margin = margin_ref[0]

    # Fused form of (a-p)^2 - (a-n)^2: one multiply per element and a single
    # cross-lane reduction instead of two.
    diff = (p - n) * (p + n - 2.0 * a)               # (TB, D)
    delta = jnp.sum(diff, axis=1, keepdims=True)      # (TB, 1)
    losses = jnp.maximum(delta + margin, 0.0)         # (TB, 1)

    def _write(vals):
        # Lane-dense partial-sum output (full unmasked vst); wrapper reads
        # lane 0 of each tile's row.
        out_ref[...] = jnp.full((1, 128), jnp.sum(vals), dtype=jnp.float32)

    if mask_rows:
        last = pl.num_programs(0) - 1

        @pl.when(pl.program_id(0) == last)
        def _():
            # Partial last tile: rows >= batch hold unspecified data (possibly
            # NaN/Inf).  Select-mask them before the tile-level reduction.
            row_ids = last * tile_b + jax.lax.broadcasted_iota(
                jnp.int32, (tile_b, 1), 0)
            _write(jnp.where(row_ids < batch, losses, 0.0))

        @pl.when(pl.program_id(0) != last)
        def _():
            _write(losses)
    else:
        _write(losses)


def _ceil_to(x, m):
    return ((x + m - 1) // m) * m


def _choose_tile_b(batch, d, itemsize):
    """Rows per grid step.

    Sized by bytes so each input DMA block lands in the ~2 MiB sweet spot
    (85%+ of HBM roofline) while 3 inputs x 2 pipeline buffers stay under
    ~24 MiB — safe inside v7x's 64 MiB physical VMEM and trivially inside
    v5e/v6e's 128 MiB.
    """
    sublane = max(8, 32 // itemsize)           # 8 for f32, 16 for bf16/f16
    row_bytes = max(d * itemsize, 1)
    target_block_bytes = 2 * 1024 * 1024       # ~2 MiB per input block
    budget_bytes = 24 * 1024 * 1024            # 3 inputs x 2 buffers

    tb = max(target_block_bytes // row_bytes, 1)
    tb = min(tb, max(budget_bytes // (6 * row_bytes), 1))
    tb = max(sublane, (tb // sublane) * sublane)

    # v7x megacore: keep >= 2 grid steps when the batch allows it, so the
    # "parallel" batch axis shards across both TensorCores.
    if batch >= 2 * sublane:
        tb = min(tb, _ceil_to((batch + 1) // 2, sublane))

    # Never make the tile bigger than the sublane-rounded batch itself.
    tb = min(tb, _ceil_to(batch, sublane))
    return tb


def triplet_loss(anchor, positive, negative, margin, size_average=True):
    """Pallas implementation of TripletLoss.forward.

    anchor/positive/negative: (B, D) arrays (f32/bf16/fp16).  Returns a
    scalar float32 (mean if size_average else sum of hinge losses).
    """
    B, D = anchor.shape
    itemsize = jnp.dtype(anchor.dtype).itemsize
    TB = _choose_tile_b(B, D, itemsize)
    num_tiles = pl.cdiv(B, TB)
    mask_rows = (B % TB) != 0

    margin_arr = jnp.asarray(margin, dtype=jnp.float32).reshape((1,))

    kernel = functools.partial(
        _triplet_loss_kernel, batch=B, tile_b=TB, mask_rows=mask_rows)

    cost = pl.CostEstimate(
        flops=6 * B * D,
        transcendentals=0,
        bytes_accessed=3 * B * D * itemsize + num_tiles * 128 * 4,
    )

    partials = pl.pallas_call(
        kernel,
        out_shape=jax.ShapeDtypeStruct((num_tiles, 128), jnp.float32),
        grid=(num_tiles,),
        in_specs=[
            pl.BlockSpec(memory_space=pltpu.MemorySpace.SMEM),   # margin
            pl.BlockSpec((TB, D), lambda i: (i, 0)),             # anchor
            pl.BlockSpec((TB, D), lambda i: (i, 0)),             # positive
            pl.BlockSpec((TB, D), lambda i: (i, 0)),             # negative
        ],
        out_specs=pl.BlockSpec((1, 128), lambda i: (i, 0)),
        compiler_params=pltpu.CompilerParams(
            dimension_semantics=("parallel",),
            vmem_limit_bytes=32 * 1024 * 1024,
        ),
        cost_estimate=cost,
    )(margin_arr, anchor, positive, negative)

    total = jnp.sum(partials[:, 0])
    return total / B if size_average else total


def triplet_loss_ref(anchor, positive, negative, margin, size_average=True):
    a = anchor.astype(jnp.float32)
    p = positive.astype(jnp.float32)
    n = negative.astype(jnp.float32)
    dp = jnp.sum((a - p) ** 2, axis=1)
    dn = jnp.sum((a - n) ** 2, axis=1)
    losses = jax.nn.relu(dp - dn + margin)
    return jnp.mean(losses) if size_average else jnp.sum(losses)


if __name__ == "__main__":
    margin = 1.0

    def _check(a, p, n, rtol, atol):
        for size_average in (True, False):
            out = jax.block_until_ready(
                triplet_loss(a, p, n, margin, size_average=size_average))
            ref = triplet_loss_ref(a, p, n, margin, size_average=size_average)
            assert jnp.allclose(out, ref, rtol=rtol, atol=atol), (
                size_average, out, ref)

    # Case 1: small aligned batch, f32 (single tile, no row masking).
    B, D = 8, 32
    k_a, k_p, k_n = jax.random.split(jax.random.PRNGKey(0), 3)
    anchor = jax.random.normal(k_a, (B, D), dtype=jnp.float32)
    positive = jax.random.normal(k_p, (B, D), dtype=jnp.float32)
    negative = jax.random.normal(k_n, (B, D), dtype=jnp.float32)
    _check(anchor, positive, negative, rtol=1e-4, atol=1e-4)

    # Case 2: ragged batch, f32 (exercises the partial-tile row mask).
    B2, D2 = 13, 32
    k_a2, k_p2, k_n2 = jax.random.split(jax.random.PRNGKey(1), 3)
    a2 = jax.random.normal(k_a2, (B2, D2), dtype=jnp.float32)
    p2 = jax.random.normal(k_p2, (B2, D2), dtype=jnp.float32)
    n2 = jax.random.normal(k_n2, (B2, D2), dtype=jnp.float32)
    _check(a2, p2, n2, rtol=1e-4, atol=1e-4)

    # Case 3: bf16 inputs, larger batch (exercises no-upcast HBM reads,
    # 16-row sublane rounding, multi-tile grid and last-tile masking).
    B3, D3 = 40, 48
    k_a3, k_p3, k_n3 = jax.random.split(jax.random.PRNGKey(2), 3)
    a3 = jax.random.normal(k_a3, (B3, D3), dtype=jnp.float32).astype(jnp.bfloat16)
    p3 = jax.random.normal(k_p3, (B3, D3), dtype=jnp.float32).astype(jnp.bfloat16)
    n3 = jax.random.normal(k_n3, (B3, D3), dtype=jnp.float32).astype(jnp.bfloat16)
    _check(a3, p3, n3, rtol=1e-3, atol=5e-2)

    print("KERNEL_OK")
</pallas_src>

<mosaic_0001>
module attributes {stable_mosaic.version = 11 : i64} {
  func.func @_triplet_loss_kernel(%arg0: i32, %arg1: memref<1xf32, #tpu.memory_space<smem>>, %arg2: memref<8x32xf32, #tpu.memory_space<vmem>>, %arg3: memref<8x32xf32, #tpu.memory_space<vmem>>, %arg4: memref<8x32xf32, #tpu.memory_space<vmem>>, %arg5: memref<1x128xf32, #tpu.memory_space<vmem>>) attributes {dimension_semantics = [#tpu.dimension_semantics<parallel>], iteration_bounds = array<i64: 1>, scalar_prefetch = 0 : i64, scratch_operands = 0 : i64, tpu.core_type = #tpu.core_type<tc>, window_params = [{transform_indices = @transform_0, window_bounds = array<i64: 1>}, {transform_indices = @transform_1, window_bounds = array<i64: 8, 32>}, {transform_indices = @transform_2, window_bounds = array<i64: 8, 32>}, {transform_indices = @transform_3, window_bounds = array<i64: 8, 32>}, {transform_indices = @transform_4, window_bounds = array<i64: 1, 128>}]} {
    %c0 = arith.constant 0 : index
    %c0_0 = arith.constant 0 : index
    %0 = vector.load %arg2[%c0, %c0_0] : memref<8x32xf32, #tpu.memory_space<vmem>>, vector<8x32xf32>
    %c0_1 = arith.constant 0 : index
    %c0_2 = arith.constant 0 : index
    %1 = vector.load %arg3[%c0_1, %c0_2] : memref<8x32xf32, #tpu.memory_space<vmem>>, vector<8x32xf32>
    %c0_3 = arith.constant 0 : index
    %c0_4 = arith.constant 0 : index
    %2 = vector.load %arg4[%c0_3, %c0_4] : memref<8x32xf32, #tpu.memory_space<vmem>>, vector<8x32xf32>
    %c0_5 = arith.constant 0 : index
    %3 = memref.load %arg1[%c0_5] : memref<1xf32, #tpu.memory_space<smem>>
    %4 = arith.subf %1, %2 : vector<8x32xf32>
    %5 = arith.addf %1, %2 : vector<8x32xf32>
    %cst = arith.constant 2.000000e+00 : f32
    %6 = vector.broadcast %cst : f32 to vector<8x32xf32>
    %7 = arith.mulf %6, %0 : vector<8x32xf32>
    %8 = arith.subf %5, %7 : vector<8x32xf32>
    %9 = arith.mulf %4, %8 : vector<8x32xf32>
    %cst_6 = arith.constant dense<0.000000e+00> : vector<8xf32>
    %10 = vector.multi_reduction <add>, %9, %cst_6 [1] : vector<8x32xf32> to vector<8xf32>
    %11 = vector.shape_cast %10 : vector<8xf32> to vector<8x1xf32>
    %12 = vector.broadcast %3 : f32 to vector<8x1xf32>
    %13 = arith.addf %11, %12 : vector<8x1xf32>
    %cst_7 = arith.constant 0.000000e+00 : f32
    %14 = vector.broadcast %cst_7 : f32 to vector<8x1xf32>
    %15 = arith.maximumf %13, %14 : vector<8x1xf32>
    %16 = vector.shape_cast %15 : vector<8x1xf32> to vector<1x8x1xf32>
    %cst_8 = arith.constant dense<0.000000e+00> : vector<1xf32>
    %17 = vector.multi_reduction <add>, %16, %cst_8 [1, 2] : vector<1x8x1xf32> to vector<1xf32>
    %18 = vector.shape_cast %17 : vector<1xf32> to vector<1x1x1xf32>
    %19 = vector.extract %18[0, 0, 0] : f32 from vector<1x1x1xf32>
    %20 = vector.broadcast %19 : f32 to vector<1x128xf32>
    %c0_9 = arith.constant 0 : index
    %c0_10 = arith.constant 0 : index
    %21 = vector.load %arg5[%c0_9, %c0_10] : memref<1x128xf32, #tpu.memory_space<vmem>>, vector<1x128xf32>
    tpu.vector_store %arg5[%c0_9, %c0_10], %20 {strides = array<i32>} : memref<1x128xf32, #tpu.memory_space<vmem>>, vector<1x128xf32>,
    return
  }
  func.func @transform_0(%arg0: i32) -> i32 {
    %c0_i32 = arith.constant 0 : i32
    %c0_i32_0 = arith.constant 0 : i32
    return %c0_i32 : i32
  }
  func.func @transform_1(%arg0: i32) -> (i32, i32) {
    %c0_i32 = arith.constant 0 : i32
    %c0_i32_0 = arith.constant 0 : i32
    return %arg0, %c0_i32 : i32, i32
  }
  func.func @transform_2(%arg0: i32) -> (i32, i32) {
    %c0_i32 = arith.constant 0 : i32
    %c0_i32_0 = arith.constant 0 : i32
    return %arg0, %c0_i32 : i32, i32
  }
  func.func @transform_3(%arg0: i32) -> (i32, i32) {
    %c0_i32 = arith.constant 0 : i32
    %c0_i32_0 = arith.constant 0 : i32
    return %arg0, %c0_i32 : i32, i32
  }
  func.func @transform_4(%arg0: i32) -> (i32, i32) {
    %c0_i32 = arith.constant 0 : i32
    %c0_i32_0 = arith.constant 0 : i32
    return %arg0, %c0_i32 : i32, i32
  }
}

</mosaic_0001>

<llo_original>
// kernel: tpu_custom_call.1
$region0: #{tpu_custom_call.1}
  #allocation0 [shape = 'u32[]', space=smem, size = 0x4, offset = 0x4, fixed_abs, tag = 'smem constant byte address 0x4 - core index']
  #allocation1 [shape = 'u32[144,128]{1,0:T(1,128)}', space=vmem, size = 0x12000, scoped, tag = 'internal scratch']
  #allocation2 [shape = 'f32[1]{0:T(128)S(6)}', space=smem, size = 0x200, scoped, tag = 'scoped memory for tpu_custom_call.1']
  %s0 = inlined_call_operand.<no memory space> [shape: f32[1], index: 0, kind: input, shape index: {}]
  %s1 = inlined_call_operand.hbm [shape: f32[8,32], index: 1, kind: input, shape index: {}]
  %s2 = inlined_call_operand.hbm [shape: f32[8,32], index: 2, kind: input, shape index: {}]
  %s3 = inlined_call_operand.vmem [shape: f32[8,32], index: 3, kind: input, shape index: {}]
  %s4 = inlined_call_operand.hbm [shape: f32[1,128], index: 4, kind: output, shape index: {}]
  %s5 = sld [smem:[#allocation0]]
  $region34: #{tpu_custom_call.1} parent=0
    _
  %s7 = ssub.s32 1, %s5
  %s8 = scalar_select 0, %s7, %s5
  %9 = sst [smem:[#allocation2]] %s0
  $region1: #{tpu_custom_call.1} parent=0
    #allocation3 [shape = 'u8[4096]{0}', space=vmem, size = 0x1000, scoped, tag = 'input window, operand 1, single buffered']
    #allocation4 [shape = 's32[1]{0}', space=sflag, size = 0x4, scoped, tag = 'scoped memory for tpu_custom_call.1']
    #allocation5 [shape = 's32[1]{0}', space=sflag, size = 0x4, scoped, tag = 'scoped memory for tpu_custom_call.1']
    #allocation6 [shape = 'u8[4096]{0}', space=vmem, size = 0x1000, scoped, tag = 'input window, operand 2, single buffered']
    #allocation7 [shape = 's32[1]{0}', space=sflag, size = 0x4, scoped, tag = 'scoped memory for tpu_custom_call.1']
    #allocation8 [shape = 'u8[512]{0}', space=vmem, size = 0x400, scoped, tag = 'output window, operand 0, single buffered']
    %10 = vsyncpa [#allocation4], 0
    %11 = vsyncpa [#allocation7], 0
    %12 = vsyncpa [#allocation5], 0
    // Predicated region
    $region2: #{tpu_custom_call.1} parent=1 // pred_check
      _
    $region3: #{tpu_custom_call.1} parent=1 // pred_check_branch
      %14 = sbr.rel (0) target = $region5
    $region4: #{tpu_custom_call.1} parent=1 // pred_region
      _
    $region5: #{tpu_custom_call.1} parent=1 // pred_fallthru
      _
    // Predicated region
    $region6: #{tpu_custom_call.1} parent=1 // pred_check
      _
    $region7: #{tpu_custom_call.1} parent=1 // pred_check_branch
      %16 = sbr.rel (0) target = $region9
    $region8: #{tpu_custom_call.1} parent=1 // pred_region
      %s18 = ssub.s32 128, 128
      %19 = vsyncadd [#allocation4], %s18
      %s21 = sshll.u32 [#allocation3], 4
      %s22 = int_to_ptr.vmem [resolvable:$true] %s21
      %24 = dma.hbm_to_vmem [thread:$0]  %s1, 128, %s22, [#allocation4]
    $region9: #{tpu_custom_call.1} parent=1 // pred_fallthru
      _
    // Predicated region
    $region10: #{tpu_custom_call.1} parent=1 // pred_check
      _
    $region11: #{tpu_custom_call.1} parent=1 // pred_check_branch
      %26 = sbr.rel (0) target = $region13
    $region12: #{tpu_custom_call.1} parent=1 // pred_region
      %s28 = ssub.s32 128, 128
      %29 = vsyncadd [#allocation7], %s28
      %s31 = sshll.u32 [#allocation6], 4
      %s32 = int_to_ptr.vmem [resolvable:$true] %s31
      %34 = dma.hbm_to_vmem [thread:$0]  %s2, 128, %s32, [#allocation7]
    $region13: #{tpu_custom_call.1} parent=1 // pred_fallthru
      _
    // Predicated region
    $region14: #{tpu_custom_call.1} parent=1 // pred_check
      _
    $region15: #{tpu_custom_call.1} parent=1 // pred_check_branch
      %36 = sbr.rel (0) target = $region17
    $region16: #{tpu_custom_call.1} parent=1 // pred_region
      _
    $region17: #{tpu_custom_call.1} parent=1 // pred_fallthru
      _
    // Predicated region
    $region18: #{tpu_custom_call.1} parent=1 // pred_check
      _
    $region19: #{tpu_custom_call.1} parent=1 // pred_check_branch
      %38 = sbr.rel (0) target = $region21
    $region20: #{tpu_custom_call.1} parent=1 // pred_region
      %39 = dma.done [#allocation4], 128
    $region21: #{tpu_custom_call.1} parent=1 // pred_fallthru
      _
    // Predicated region
    $region22: #{tpu_custom_call.1} parent=1 // pred_check
      _
    $region23: #{tpu_custom_call.1} parent=1 // pred_check_branch
      %41 = sbr.rel (0) target = $region25
    $region24: #{tpu_custom_call.1} parent=1 // pred_region
      %42 = dma.done [#allocation7], 128
    $region25: #{tpu_custom_call.1} parent=1 // pred_fallthru
      _
    %v43 = vld [vmem:[#allocation3] sm:$0xff]
    %v44 = vld [vmem:[#allocation6] sm:$0xff]
    %v45 = vld [vmem:[%s3] sm:$0xff]
    %s46 = sld [smem:[#allocation2]]
    %v47 = vsub.f32 %v44, %v45
    %v48 = vadd.f32 %v44, %v45
    %v49 = vmul.f32 %v43, 2.0
    %v50 = vsub.f32 %v48, %v49
    %v51 = vmul.f32 %v47, %v50
    %vm52 = vcmask 261120
    %v53 = vsel %vm52, %v51, 0.0
    %54 = vadd.xlane.f32.xlu0 %v53
    %v55 = vpop.xlane.xlu0 %54
    %v56 = vstv %s46
    %v57 = vadd.f32 %v55, %v56
    %v58 = vmax.f32 %v57, 0.0
    %vm59 = vcmask 7168
    %v60 = vsel %vm59, %v58, 0.0
    %61 = vadd.xlane.f32.xlu0 %v60
    %v62 = vpop.xlane.xlu0 %61
    %v63 = vrot.slane %v62, 4
    %v64 = vadd.f32 %v62, %v63
    %v65 = vrot.slane %v64, 2
    %v66 = vadd.f32 %v64, %v65
    %v67 = vrot.slane %v66, 1
    %v68 = vadd.f32 %v66, %v67
    %s69 = vtos %v68
    %v70 = vstv %s69
    %71 = vst [vmem:[#allocation8] sm:$0x1] %v70
    // Predicated region
    $region26: #{tpu_custom_call.1} parent=1 // pred_check
      _
    $region27: #{tpu_custom_call.1} parent=1 // pred_check_branch
      %73 = sbr.rel (0) target = $region29
    $region28: #{tpu_custom_call.1} parent=1 // pred_region
      %s75 = ssub.s32 16, 16
      %76 = vsyncadd [#allocation5], %s75
      %s78 = sshll.u32 [#allocation8], 4
      %s79 = int_to_ptr.vmem [resolvable:$true] %s78
      %81 = dma.vmem_to_hbm [thread:$0]  %s79, 16, %s4, [#allocation5]
    $region29: #{tpu_custom_call.1} parent=1 // pred_fallthru
      _
    // Predicated region
    $region30: #{tpu_custom_call.1} parent=1 // pred_check
      _
    $region31: #{tpu_custom_call.1} parent=1 // pred_check_branch
      %83 = sbr.rel (0) target = $region33
    $region32: #{tpu_custom_call.1} parent=1 // pred_region
      %84 = dma.done [#allocation5], 16
    $region33: #{tpu_custom_call.1} parent=1 // pred_fallthru
      _
    %85 = vsyncpa [#allocation4], 1
    %86 = vsyncpa [#allocation7], 1
    %87 = vsyncpa [#allocation5], 1

</llo_original>
